<compile_context>
chip_gen: v5e
topology: v5e:2x2
jax: 0.10.0
libtpu: 0.0.40
codegen_flags: <defaults>
</compile_context>

<pallas_src>
import functools

import jax
import jax.numpy as jnp
from jax.experimental import pallas as pl
from jax.experimental.pallas import tpu as pltpu

LANE = 128          # per-head feature slab width (lane dimension)
NEG_INF = -1e30     # additive mask value for non-edges


def _round_up(x, m):
    return ((x + m - 1) // m) * m


def _vmem_limit(working_set_bytes):
    # Scoped-VMEM request: working set + margin, clamped to a range valid on
    # v5e/v6e (128 MiB physical) and v7x (64 MiB physical).
    return int(min(max(working_set_bytes + (8 << 20), 32 << 20), 48 << 20))


# ----------------------------------------------------------------------------
# Kernel 1a: projection  z = x @ W  and per-head attention coefficients
#            alpha = z @ A  (block-diagonal A: lanes [0,H) = a_src, [H,2H) = a_dst)
# ----------------------------------------------------------------------------
def _gat_project_kernel(x_ref, w_ref, a_ref, z_ref, alpha_ref):
    z = jnp.dot(x_ref[...], w_ref[...], preferred_element_type=jnp.float32)
    alpha_ref[...] = jnp.dot(z.astype(jnp.bfloat16), a_ref[...],
                             preferred_element_type=jnp.float32)
    z_ref[...] = z.astype(jnp.bfloat16)


# ----------------------------------------------------------------------------
# Kernel 1b: tiled masked softmax + aggregation (online softmax over src blocks)
# ----------------------------------------------------------------------------
def _gat_attn_kernel(adst_ref, asrcT_ref, z_ref, bias_ref, b_ref, o_ref,
                     m_ref, l_ref, acc_ref, *, num_heads):
    k = pl.program_id(1)

    @pl.when(k == 0)
    def _init():
        m_ref[...] = jnp.full(m_ref.shape, -jnp.inf, m_ref.dtype)
        l_ref[...] = jnp.zeros(l_ref.shape, l_ref.dtype)
        acc_ref[...] = jnp.zeros(acc_ref.shape, acc_ref.dtype)

    bias = bias_ref[...].astype(jnp.float32)      # (TM, TK) additive mask, bf16 in HBM
    z_src = z_ref[...]                            # (TK, H*LANE) bf16
    adst = adst_ref[...]                          # (TM, H) f32
    asrcT = asrcT_ref[...]                        # (H, TK) f32

    for h in range(num_heads):
        # e[i, j] = leaky_relu(a_dst[i] + a_src[j], 0.2) + mask
        e = adst[:, h:h + 1] + asrcT[h:h + 1, :]                    # (TM, TK)
        e = jnp.where(e > 0, e, 0.2 * e)
        e = e + bias                                                # single add (no selects)

        m_prev = m_ref[h]                                           # (TM, 1)
        m_new = jnp.maximum(m_prev, jnp.max(e, axis=-1, keepdims=True))
        corr = jnp.exp(m_prev - m_new)
        p = jnp.exp(e - m_new)                  # masked entries underflow to exactly 0
        l_ref[h] = corr * l_ref[h] + jnp.sum(p, axis=-1, keepdims=True)

        zh = z_src[:, h * LANE:(h + 1) * LANE]                      # lane-aligned slab
        acc_ref[h] = corr * acc_ref[h] + jnp.dot(
            p.astype(jnp.bfloat16), zh, preferred_element_type=jnp.float32)
        m_ref[h] = m_new

    @pl.when(k == pl.num_programs(1) - 1)
    def _finalize():
        b = b_ref[...]                                              # (1, H*LANE)
        for h in range(num_heads):
            inv_l = pl.reciprocal(l_ref[h], approx=True)
            out_h = acc_ref[h] * inv_l + b[:, h * LANE:(h + 1) * LANE]
            o_ref[:, h * LANE:(h + 1) * LANE] = jnp.maximum(out_h, 0.0).astype(o_ref.dtype)


def gat_layer(x, bias_mask, w_pad, a_pad, b_pad, *, num_heads, tm, tk):
    """One GATConv (+ReLU) layer on padded, per-head-slab node features."""
    n_pad, fin_pad = x.shape
    fout_pad = w_pad.shape[1]

    # --- projection + attention coefficients -------------------------------
    proj_ws = 2 * (tm * fin_pad * 2 + tm * fout_pad * 2 + tm * LANE * 4) \
        + fin_pad * fout_pad * 2 + fout_pad * LANE * 2
    z, alpha = pl.pallas_call(
        _gat_project_kernel,
        out_shape=(jax.ShapeDtypeStruct((n_pad, fout_pad), jnp.bfloat16),
                   jax.ShapeDtypeStruct((n_pad, LANE), jnp.float32)),
        grid_spec=pltpu.PrefetchScalarGridSpec(
            num_scalar_prefetch=0,
            grid=(n_pad // tm,),
            in_specs=[pl.BlockSpec((tm, fin_pad), lambda i: (i, 0)),
                      pl.BlockSpec((fin_pad, fout_pad), lambda i: (0, 0)),
                      pl.BlockSpec((fout_pad, LANE), lambda i: (0, 0))],
            out_specs=[pl.BlockSpec((tm, fout_pad), lambda i: (i, 0)),
                       pl.BlockSpec((tm, LANE), lambda i: (i, 0))]),
        compiler_params=pltpu.CompilerParams(
            dimension_semantics=("parallel",),
            vmem_limit_bytes=_vmem_limit(proj_ws)),
    )(x, w_pad, a_pad)

    adst = alpha[:, num_heads:2 * num_heads]       # (N_pad, H) f32
    asrcT = alpha[:, :num_heads].T                 # (H, N_pad) f32 (tiny glue transpose)

    # --- tiled flash-style masked softmax aggregation ------------------------
    attn_ws = 2 * (tm * num_heads * 4 + num_heads * tk * 4 + tk * fout_pad * 2
                   + tm * tk * 2 + fout_pad * 4) \
        + 2 * tm * fout_pad * 2 + num_heads * tm * (LANE + 2) * 4
    kern = functools.partial(_gat_attn_kernel, num_heads=num_heads)
    return pl.pallas_call(
        kern,
        out_shape=jax.ShapeDtypeStruct((n_pad, fout_pad), jnp.bfloat16),
        grid_spec=pltpu.PrefetchScalarGridSpec(
            num_scalar_prefetch=0,
            grid=(n_pad // tm, n_pad // tk),
            in_specs=[pl.BlockSpec((tm, num_heads), lambda i, k: (i, 0)),
                      pl.BlockSpec((num_heads, tk), lambda i, k: (0, k)),
                      pl.BlockSpec((tk, fout_pad), lambda i, k: (k, 0)),
                      pl.BlockSpec((tm, tk), lambda i, k: (i, k)),
                      pl.BlockSpec((1, fout_pad), lambda i, k: (0, 0))],
            out_specs=pl.BlockSpec((tm, fout_pad), lambda i, k: (i, 0)),
            scratch_shapes=[pltpu.VMEM((num_heads, tm, 1), jnp.float32),
                            pltpu.VMEM((num_heads, tm, 1), jnp.float32),
                            pltpu.VMEM((num_heads, tm, LANE), jnp.float32)]),
        compiler_params=pltpu.CompilerParams(
            dimension_semantics=("parallel", "arbitrary"),
            vmem_limit_bytes=_vmem_limit(attn_ws)),
    )(adst, asrcT, z, bias_mask, b_pad)


# ----------------------------------------------------------------------------
# Kernel 2: tiled mean-pool accumulation + readout MLP + news branch + sigmoid
# ----------------------------------------------------------------------------
def _head_kernel(pool_ref, h_ref, xroot_ref, wro_ref, bro_ref, wn_ref, bn_ref,
                 wc1_ref, wc2_ref, bc_ref, o_ref, pooled_ref):
    n = pl.program_id(0)

    @pl.when(n == 0)
    def _init():
        pooled_ref[...] = jnp.zeros(pooled_ref.shape, pooled_ref.dtype)

    pooled_ref[...] += jnp.dot(pool_ref[...], h_ref[...],
                               preferred_element_type=jnp.float32)

    @pl.when(n == pl.num_programs(0) - 1)
    def _finalize():
        pooled = pooled_ref[...].astype(jnp.bfloat16)
        h2 = jnp.maximum(
            jnp.dot(pooled, wro_ref[...], preferred_element_type=jnp.float32)
            + bro_ref[...], 0.0)
        news = jnp.maximum(
            jnp.dot(xroot_ref[...], wn_ref[...], preferred_element_type=jnp.float32)
            + bn_ref[...], 0.0)
        logits = (jnp.dot(h2.astype(jnp.bfloat16), wc1_ref[...],
                          preferred_element_type=jnp.float32)
                  + jnp.dot(news.astype(jnp.bfloat16), wc2_ref[...],
                            preferred_element_type=jnp.float32)
                  + bc_ref[...])
        o_ref[...] = jax.nn.sigmoid(logits)


def head(pool_mat, h, x_root, w_ro, b_ro, w_n, b_n, w_c1, w_c2, b_c, *, tn):
    b_rows, n_pad = pool_mat.shape
    fpad = h.shape[1]
    fin_pad = x_root.shape[1]
    r_pad = w_ro.shape[1]
    news_pad = w_n.shape[1]
    out_pad = b_c.shape[1]
    assert n_pad % tn == 0
    ws = 2 * (b_rows * tn * 2 + tn * fpad * 2) \
        + fin_pad * (b_rows + news_pad) * 2 + fpad * r_pad * 2 \
        + (r_pad + news_pad) * out_pad * 2 + b_rows * (fpad + out_pad) * 4
    return pl.pallas_call(
        _head_kernel,
        out_shape=jax.ShapeDtypeStruct((b_rows, out_pad), jnp.float32),
        grid_spec=pltpu.PrefetchScalarGridSpec(
            num_scalar_prefetch=0,
            grid=(n_pad // tn,),
            in_specs=[pl.BlockSpec((b_rows, tn), lambda i: (0, i)),
                      pl.BlockSpec((tn, fpad), lambda i: (i, 0)),
                      pl.BlockSpec((b_rows, fin_pad), lambda i: (0, 0)),
                      pl.BlockSpec((fpad, r_pad), lambda i: (0, 0)),
                      pl.BlockSpec((1, r_pad), lambda i: (0, 0)),
                      pl.BlockSpec((fin_pad, news_pad), lambda i: (0, 0)),
                      pl.BlockSpec((1, news_pad), lambda i: (0, 0)),
                      pl.BlockSpec((r_pad, out_pad), lambda i: (0, 0)),
                      pl.BlockSpec((news_pad, out_pad), lambda i: (0, 0)),
                      pl.BlockSpec((1, out_pad), lambda i: (0, 0))],
            out_specs=pl.BlockSpec((b_rows, out_pad), lambda i: (0, 0)),
            scratch_shapes=[pltpu.VMEM((b_rows, fpad), jnp.float32)]),
        compiler_params=pltpu.CompilerParams(
            dimension_semantics=("arbitrary",),
            vmem_limit_bytes=_vmem_limit(ws)),
    )(pool_mat, h, x_root, w_ro, b_ro, w_n, b_n, w_c1, w_c2, b_c)


# ----------------------------------------------------------------------------
# Parameter construction (raw PyTorch-shaped) and lane-aligned padding
# ----------------------------------------------------------------------------
def make_params(key, in_dim, hidden_dims, num_heads, readout_dim, news_dim, out_dim):
    params = {}
    d_in = in_dim
    for li, hd in enumerate(hidden_dims):
        key, k1, k2, k3 = jax.random.split(key, 4)
        w = 0.1 * jax.random.normal(k1, (d_in, num_heads * hd), jnp.float32)
        a_s = 0.1 * jax.random.normal(k2, (num_heads, hd), jnp.float32)
        a_d = 0.1 * jax.random.normal(k3, (num_heads, hd), jnp.float32)
        b = jnp.zeros((num_heads * hd,), jnp.float32)
        params[f"gat{li}"] = (w, a_s, a_d, b)
        d_in = num_heads * hd
    feat = num_heads * hidden_dims[-1]
    key, k1, k2, k3 = jax.random.split(key, 4)
    params["readout"] = (0.1 * jax.random.normal(k1, (feat, readout_dim), jnp.float32),
                         jnp.zeros((readout_dim,), jnp.float32))
    params["news"] = (0.1 * jax.random.normal(k2, (in_dim, news_dim), jnp.float32),
                      jnp.zeros((news_dim,), jnp.float32))
    w_cat = 0.1 * jax.random.normal(k3, (readout_dim + news_dim, out_dim), jnp.float32)
    params["concat"] = (w_cat, jnp.zeros((out_dim,), jnp.float32))
    return params


def _pad2d(a, rows, cols):
    out = jnp.zeros((rows, cols), a.dtype)
    return out.at[:a.shape[0], :a.shape[1]].set(a)


def _scatter_head_cols(w, num_heads, head_dim):
    # (rows, H*D) -> (rows, H*LANE): head h's D columns at lanes [h*LANE, h*LANE+D)
    out = jnp.zeros((w.shape[0], num_heads * LANE), w.dtype)
    for h in range(num_heads):
        out = out.at[:, h * LANE:h * LANE + head_dim].set(
            w[:, h * head_dim:(h + 1) * head_dim])
    return out


def _scatter_head_rows(w, num_heads, head_dim):
    # (H*D, cols) -> (H*LANE, cols)
    out = jnp.zeros((num_heads * LANE, w.shape[1]), w.dtype)
    for h in range(num_heads):
        out = out.at[h * LANE:h * LANE + head_dim, :].set(
            w[h * head_dim:(h + 1) * head_dim, :])
    return out


def _make_alpha_matrix(a_src, a_dst, num_heads, head_dim):
    # Block-diagonal matrix so alpha = z @ A yields a_src (lanes [0,H)) and
    # a_dst (lanes [H,2H)) for every head in a single lane-dense MXU matmul.
    a = jnp.zeros((num_heads * LANE, LANE), jnp.float32)
    for h in range(num_heads):
        a = a.at[h * LANE:h * LANE + head_dim, h].set(a_src[h])
        a = a.at[h * LANE:h * LANE + head_dim, num_heads + h].set(a_dst[h])
    return a.astype(jnp.bfloat16)


def pad_params(raw, *, in_dim, hidden_dims, num_heads, readout_dim, news_dim, out_dim):
    assert 2 * num_heads <= LANE
    fin_pad = _round_up(in_dim, LANE)
    r_pad = _round_up(readout_dim, LANE)
    news_pad = _round_up(news_dim, LANE)
    out_pad = _round_up(out_dim, LANE)
    padded = {}
    d_prev = None
    for li, hd in enumerate(hidden_dims):
        assert hd <= LANE
        w, a_s, a_d, b = raw[f"gat{li}"]
        w = _scatter_head_cols(w, num_heads, hd)
        if li == 0:
            w = _pad2d(w, fin_pad, num_heads * LANE)
        else:
            w = _scatter_head_rows(w, num_heads, d_prev)
        padded[f"gat{li}"] = (w.astype(jnp.bfloat16),
                              _make_alpha_matrix(a_s, a_d, num_heads, hd),
                              _scatter_head_cols(b[None, :], num_heads, hd))
        d_prev = hd
    w_ro, b_ro = raw["readout"]
    padded["readout"] = (
        _pad2d(_scatter_head_rows(w_ro, num_heads, hidden_dims[-1]),
               num_heads * LANE, r_pad).astype(jnp.bfloat16),
        _pad2d(b_ro[None, :], 1, r_pad))
    w_n, b_n = raw["news"]
    padded["news"] = (_pad2d(w_n, fin_pad, news_pad).astype(jnp.bfloat16),
                      _pad2d(b_n[None, :], 1, news_pad))
    w_cat, b_c = raw["concat"]
    padded["concat"] = (
        _pad2d(w_cat[:readout_dim], r_pad, out_pad).astype(jnp.bfloat16),
        _pad2d(w_cat[readout_dim:], news_pad, out_pad).astype(jnp.bfloat16),
        _pad2d(b_c[None, :], 1, out_pad))
    return padded


# ----------------------------------------------------------------------------
# Full forward (JAX glue: padding, mask/pooling bookkeeping, root gather)
# ----------------------------------------------------------------------------
def fake_news_net_forward(padded, x, edge_index, batch, *, num_graphs, num_heads,
                          hidden_dims, out_dim, block_m=256, block_k=512):
    n, in_dim = x.shape
    fin_pad = _round_up(in_dim, LANE)

    # tile sizes / padded node count: 128 | tm | tk | n_pad
    n_pad = _round_up(n, LANE)
    if n_pad > block_k:
        n_pad = _round_up(n_pad, block_k)
    tk = min(block_k, n_pad)
    tm = min(block_m, tk)
    if tk % tm != 0:
        tm = LANE

    x_pad = jnp.zeros((n_pad, fin_pad), jnp.float32).at[:n, :in_dim].set(x)
    x_bf = x_pad.astype(jnp.bfloat16)

    # Additive adjacency bias: 0 on edges (src->dst) and on self-loops, -1e30
    # elsewhere (bf16).  Padded rows also get a self-loop so softmax stays finite.
    # TODO(synk): replace the dense O(N^2) mask with graph-block-diagonal tiles
    # generated per tile (scalar-prefetched per-graph offsets) - graphs never
    # connect to each other, so only O(N * max_nodes_per_graph) tiles are needed.
    bias = jnp.full((n_pad, n_pad), NEG_INF, jnp.float32)
    bias = bias.at[edge_index[1], edge_index[0]].set(0.0)
    bias = bias.at[jnp.arange(n_pad), jnp.arange(n_pad)].set(0.0)
    bias = bias.astype(jnp.bfloat16)

    # GAT stack.
    # TODO(synk): fuse the layer stack into one pallas_call so the (N,N) bias
    # tile stream is read once instead of once per layer.
    h = x_bf
    for li in range(len(hidden_dims)):
        w_pad, a_pad, b_pad = padded[f"gat{li}"]
        h = gat_layer(h, bias, w_pad, a_pad, b_pad,
                      num_heads=num_heads, tm=tm, tk=tk)

    # Mean-pool matrix (rows sum to 1 over each graph's real nodes).
    b_rows = max(8, _round_up(num_graphs, 8))
    batch_i32 = batch.astype(jnp.int32)
    batch_full = jnp.concatenate(
        [batch_i32, jnp.full((n_pad - n,), -1, jnp.int32)])
    onehot = (batch_full[None, :] ==
              jnp.arange(b_rows, dtype=jnp.int32)[:, None]).astype(jnp.float32)
    counts = jnp.maximum(jnp.sum(onehot, axis=-1, keepdims=True), 1.0)
    pool_mat = (onehot / counts).astype(jnp.bfloat16)

    # Root node = first node of each graph (batch assumed sorted, as in PyG).
    first_idx = jnp.searchsorted(batch_i32, jnp.arange(num_graphs, dtype=jnp.int32))
    x_root = jnp.zeros((b_rows, fin_pad), jnp.bfloat16).at[:num_graphs].set(
        x_bf[first_idx])

    w_ro, b_ro = padded["readout"]
    w_n, b_n = padded["news"]
    w_c1, w_c2, b_c = padded["concat"]
    out = head(pool_mat, h, x_root, w_ro, b_ro, w_n, b_n, w_c1, w_c2, b_c, tn=tk)
    return out[:num_graphs, :out_dim]


if __name__ == "__main__":
    # Small synthetic problem: 2 graphs of 8 nodes each.
    NODES_PER_GRAPH = 8
    NUM_GRAPHS = 2
    N = NODES_PER_GRAPH * NUM_GRAPHS
    IN_DIM = 12
    HIDDEN_DIMS = [8, 8]
    NUM_HEADS = 2
    READOUT_DIM = 16
    NEWS_DIM = 8
    OUT_DIM = 1

    key = jax.random.PRNGKey(0)
    key, kx = jax.random.split(key)
    x = jax.random.normal(kx, (N, IN_DIM), jnp.float32)

    # Deterministic edge list: bidirectional chain + star to each graph's root.
    src, dst = [], []
    for g in range(NUM_GRAPHS):
        base = g * NODES_PER_GRAPH
        for i in range(NODES_PER_GRAPH - 1):
            src += [base + i, base + i + 1]
            dst += [base + i + 1, base + i]
        for j in range(2, NODES_PER_GRAPH):
            src += [base, base + j]
            dst += [base + j, base]
    edge_index = jnp.array([src, dst], dtype=jnp.int32)
    batch = jnp.repeat(jnp.arange(NUM_GRAPHS, dtype=jnp.int32), NODES_PER_GRAPH)

    raw = make_params(key, IN_DIM, HIDDEN_DIMS, NUM_HEADS,
                      READOUT_DIM, NEWS_DIM, OUT_DIM)
    padded = pad_params(raw, in_dim=IN_DIM, hidden_dims=HIDDEN_DIMS,
                        num_heads=NUM_HEADS, readout_dim=READOUT_DIM,
                        news_dim=NEWS_DIM, out_dim=OUT_DIM)

    out = fake_news_net_forward(padded, x, edge_index, batch,
                                num_graphs=NUM_GRAPHS, num_heads=NUM_HEADS,
                                hidden_dims=HIDDEN_DIMS, out_dim=OUT_DIM)
    out = jax.block_until_ready(out)
    assert out.shape == (NUM_GRAPHS, OUT_DIM)
    assert bool(jnp.all(jnp.isfinite(out)))
    assert bool(jnp.all((out >= 0.0) & (out <= 1.0)))
    print("KERNEL_OK")
</pallas_src>

<mosaic_0001>
module attributes {stable_mosaic.version = 11 : i64} {
  func.func @_gat_project_kernel(%arg0: i32, %arg1: memref<128x128xbf16, #tpu.memory_space<vmem>>, %arg2: memref<128x256xbf16, #tpu.memory_space<vmem>>, %arg3: memref<256x128xbf16, #tpu.memory_space<vmem>>, %arg4: memref<128x256xbf16, #tpu.memory_space<vmem>>, %arg5: memref<128x128xf32, #tpu.memory_space<vmem>>) attributes {dimension_semantics = [#tpu.dimension_semantics<parallel>], iteration_bounds = array<i64: 1>, scalar_prefetch = 0 : i64, scratch_operands = 0 : i64, tpu.core_type = #tpu.core_type<tc>, window_params = [{transform_indices = @transform_0, window_bounds = array<i64: 128, 128>}, {pipeline_mode = #tpu.pipeline_mode<synchronous>, transform_indices = @transform_1, window_bounds = array<i64: 128, 256>}, {pipeline_mode = #tpu.pipeline_mode<synchronous>, transform_indices = @transform_2, window_bounds = array<i64: 256, 128>}, {transform_indices = @transform_3, window_bounds = array<i64: 128, 256>}, {transform_indices = @transform_4, window_bounds = array<i64: 128, 128>}]} {
    %c0 = arith.constant 0 : index
    %c0_0 = arith.constant 0 : index
    %0 = vector.load %arg1[%c0, %c0_0] : memref<128x128xbf16, #tpu.memory_space<vmem>>, vector<128x128xbf16>
    %c0_1 = arith.constant 0 : index
    %c0_2 = arith.constant 0 : index
    %1 = vector.load %arg2[%c0_1, %c0_2] : memref<128x256xbf16, #tpu.memory_space<vmem>>, vector<128x256xbf16>
    %cst = arith.constant dense<0.000000e+00> : vector<128x256xf32>
    %2 = tpu.matmul %0, %1, %cst {dimension_numbers = #tpu.dot_dimension_numbers<[1], [0], [0], [1], [0, 0, 1, 1], [], []>} : vector<128x128xbf16>, vector<128x256xbf16>, vector<128x256xf32> -> vector<128x256xf32>
    %3 = arith.truncf %2 : vector<128x256xf32> to vector<128x256xbf16>
    %c0_3 = arith.constant 0 : index
    %c0_4 = arith.constant 0 : index
    %4 = vector.load %arg3[%c0_3, %c0_4] : memref<256x128xbf16, #tpu.memory_space<vmem>>, vector<256x128xbf16>
    %cst_5 = arith.constant dense<0.000000e+00> : vector<128x128xf32>
    %5 = tpu.matmul %3, %4, %cst_5 {dimension_numbers = #tpu.dot_dimension_numbers<[1], [0], [0], [1], [0, 0, 1, 1], [], []>} : vector<128x256xbf16>, vector<256x128xbf16>, vector<128x128xf32> -> vector<128x128xf32>
    %c0_6 = arith.constant 0 : index
    %c0_7 = arith.constant 0 : index
    %6 = vector.load %arg5[%c0_6, %c0_7] : memref<128x128xf32, #tpu.memory_space<vmem>>, vector<128x128xf32>
    tpu.vector_store %arg5[%c0_6, %c0_7], %5 {strides = array<i32>} : memref<128x128xf32, #tpu.memory_space<vmem>>, vector<128x128xf32>,
    %7 = arith.truncf %2 : vector<128x256xf32> to vector<128x256xbf16>
    %c0_8 = arith.constant 0 : index
    %c0_9 = arith.constant 0 : index
    %8 = vector.load %arg4[%c0_8, %c0_9] : memref<128x256xbf16, #tpu.memory_space<vmem>>, vector<128x256xbf16>
    tpu.vector_store %arg4[%c0_8, %c0_9], %7 {strides = array<i32>} : memref<128x256xbf16, #tpu.memory_space<vmem>>, vector<128x256xbf16>,
    return
  }
  func.func @transform_0(%arg0: i32) -> (i32, i32) {
    %c0_i32 = arith.constant 0 : i32
    %c0_i32_0 = arith.constant 0 : i32
    return %arg0, %c0_i32 : i32, i32
  }
  func.func @transform_1(%arg0: i32) -> (i32, i32) {
    %c0_i32 = arith.constant 0 : i32
    %c0_i32_0 = arith.constant 0 : i32
    %c0_i32_1 = arith.constant 0 : i32
    return %c0_i32, %c0_i32_0 : i32, i32
  }
  func.func @transform_2(%arg0: i32) -> (i32, i32) {
    %c0_i32 = arith.constant 0 : i32
    %c0_i32_0 = arith.constant 0 : i32
    %c0_i32_1 = arith.constant 0 : i32
    return %c0_i32, %c0_i32_0 : i32, i32
  }
  func.func @transform_3(%arg0: i32) -> (i32, i32) {
    %c0_i32 = arith.constant 0 : i32
    %c0_i32_0 = arith.constant 0 : i32
    return %arg0, %c0_i32 : i32, i32
  }
  func.func @transform_4(%arg0: i32) -> (i32, i32) {
    %c0_i32 = arith.constant 0 : i32
    %c0_i32_0 = arith.constant 0 : i32
    return %arg0, %c0_i32 : i32, i32
  }
}

</mosaic_0001>

<llo_original>
// kernel: tpu_custom_call.1
$region0: #{tpu_custom_call.1}
  #allocation0 [shape = 'u32[]', space=smem, size = 0x4, offset = 0x4, fixed_abs, tag = 'smem constant byte address 0x4 - core index']
  #allocation1 [shape = 'u32[72,128]{1,0:T(1,128)}', space=vmem, size = 0x9000, scoped, tag = 'internal scratch']
  %s0 = inlined_call_operand.hbm [shape: bf16[128,128], index: 0, kind: input, shape index: {}]
  %s1 = inlined_call_operand.hbm [shape: bf16[128,256], index: 1, kind: input, shape index: {}]
  %s2 = inlined_call_operand.hbm [shape: bf16[256,128], index: 2, kind: input, shape index: {}]
  %s3 = inlined_call_operand.hbm [shape: bf16[128,256], index: 3, kind: output, shape index: {0}]
  %s4 = inlined_call_operand.hbm [shape: f32[128,128], index: 4, kind: output, shape index: {1}]
  %5 = xla_tuple %s3, %s4
  %s6 = sld [smem:[#allocation0]]
  $region42: #{tpu_custom_call.1} parent=0
    _
  %s8 = ssub.s32 1, %s6
  %s9 = scalar_select 0, %s8, %s6
  $region1: #{tpu_custom_call.1} parent=0
    #allocation2 [shape = 'u8[32768]{0}', space=vmem, size = 0x8000, scoped, tag = 'input window, operand 0, single buffered']
    #allocation3 [shape = 's32[1]{0}', space=sflag, size = 0x4, scoped, tag = 'scoped memory for tpu_custom_call.1']
    #allocation4 [shape = 's32[1]{0}', space=sflag, size = 0x4, scoped, tag = 'scoped memory for tpu_custom_call.1']
    #allocation5 [shape = 'u8[65536]{0}', space=vmem, size = 0x10000, scoped, tag = 'input window, operand 1, single buffered']
    #allocation6 [shape = 's32[1]{0}', space=sflag, size = 0x4, scoped, tag = 'scoped memory for tpu_custom_call.1']
    #allocation7 [shape = 'u8[65536]{0}', space=vmem, size = 0x10000, scoped, tag = 'input window, operand 2, single buffered']
    #allocation8 [shape = 'u8[65536]{0}', space=vmem, size = 0x10000, scoped, tag = 'output window, operand 0, single buffered']
    #allocation9 [shape = 'u8[65536]{0}', space=vmem, size = 0x10000, scoped, tag = 'output window, operand 1, single buffered']
    #allocation10 [shape = 's32[1]{0}', space=sflag, size = 0x4, scoped, tag = 'scoped memory for tpu_custom_call.1']
    %10 = vsyncpa [#allocation3], 0
    %11 = vsyncpa [#allocation6], 0
    %12 = vsyncpa [#allocation4], 0
    %13 = vsyncpa [#allocation10], 0
    // Predicated region
    $region2: #{tpu_custom_call.1} parent=1 // pred_check
      _
    $region3: #{tpu_custom_call.1} parent=1 // pred_check_branch
      %15 = sbr.rel (0) target = $region5
    $region4: #{tpu_custom_call.1} parent=1 // pred_region
      %17 = vsyncadd [#allocation3], 0
      %s18 = sshll.u32 %s0, 4
      %s19 = int_to_ptr.hbm [resolvable:$true] %s18
      %s20 = sshll.u32 [#allocation2], 4
      %s21 = int_to_ptr.vmem [resolvable:$true] %s20
      %26 = dma.hbm_to_vmem [thread:$0]  %s19, 1024, %s21, [#allocation3], 64, 64, 4
    $region5: #{tpu_custom_call.1} parent=1 // pred_fallthru
      _
    // Predicated region
    $region6: #{tpu_custom_call.1} parent=1 // pred_check
      _
    $region7: #{tpu_custom_call.1} parent=1 // pred_check_branch
      %28 = sbr.rel (0) target = $region9
    $region8: #{tpu_custom_call.1} parent=1 // pred_region
      %30 = vsyncadd [#allocation6], 0
      %s31 = sshll.u32 %s1, 4
      %s32 = int_to_ptr.hbm [resolvable:$true] %s31
      %s33 = sshll.u32 [#allocation5], 4
      %s34 = int_to_ptr.vmem [resolvable:$true] %s33
      %39 = dma.hbm_to_vmem [thread:$0]  %s32, 2048, %s34, [#allocation6], 128, 128, 8
    $region9: #{tpu_custom_call.1} parent=1 // pred_fallthru
      _
    // Predicated region
    $region10: #{tpu_custom_call.1} parent=1 // pred_check
      _
    $region11: #{tpu_custom_call.1} parent=1 // pred_check_branch
      %41 = sbr.rel (0) target = $region13
    $region12: #{tpu_custom_call.1} parent=1 // pred_region
      %43 = vsyncadd [#allocation6], 0
      %s44 = sshll.u32 %s2, 4
      %s45 = int_to_ptr.hbm [resolvable:$true] %s44
      %s46 = sshll.u32 [#allocation7], 4
      %s47 = int_to_ptr.vmem [resolvable:$true] %s46
      %52 = dma.hbm_to_vmem [thread:$0]  %s45, 2048, %s47, [#allocation6], 64, 64, 4
    $region13: #{tpu_custom_call.1} parent=1 // pred_fallthru
      _
    // Predicated region
    $region14: #{tpu_custom_call.1} parent=1 // pred_check
      _
    $region15: #{tpu_custom_call.1} parent=1 // pred_check_branch
      %54 = sbr.rel (0) target = $region17
    $region16: #{tpu_custom_call.1} parent=1 // pred_region
      %56 = dma.done [#allocation3], 1024
    $region17: #{tpu_custom_call.1} parent=1 // pred_fallthru
      _
    // Predicated region
    $region18: #{tpu_custom_call.1} parent=1 // pred_check
      _
    $region19: #{tpu_custom_call.1} parent=1 // pred_check_branch
      %58 = sbr.rel (0) target = $region21
    $region20: #{tpu_custom_call.1} parent=1 // pred_region
      %60 = dma.done [#allocation6], 2048
    $region21: #{tpu_custom_call.1} parent=1 // pred_fallthru
      _
    // Predicated region
    $region22: #{tpu_custom_call.1} parent=1 // pred_check
      _
    $region23: #{tpu_custom_call.1} parent=1 // pred_check_branch
      %62 = sbr.rel (0) target = $region25
    $region24: #{tpu_custom_call.1} parent=1 // pred_region
      %64 = dma.done [#allocation6], 2048
    $region25: #{tpu_custom_call.1} parent=1 // pred_fallthru
      _
    %v65 = vld [vmem:[#allocation2] sm:$0xf]
    %v66 = vld [vmem:[#allocation2 + $0x4] sm:$0xf]
    %v67 = vld [vmem:[#allocation2 + $0x8] sm:$0xf]
    %v68 = vld [vmem:[#allocation2 + $0xc] sm:$0xf]
    %v69 = vld [vmem:[#allocation2 + $0x10] sm:$0xf]
    %v70 = vld [vmem:[#allocation2 + $0x14] sm:$0xf]
    %v71 = vld [vmem:[#allocation2 + $0x18] sm:$0xf]
    %v72 = vld [vmem:[#allocation2 + $0x1c] sm:$0xf]
    %v73 = vld [vmem:[#allocation2 + $0x20] sm:$0xf]
    %v74 = vld [vmem:[#allocation2 + $0x24] sm:$0xf]
    %v75 = vld [vmem:[#allocation2 + $0x28] sm:$0xf]
    %v76 = vld [vmem:[#allocation2 + $0x2c] sm:$0xf]
    %v77 = vld [vmem:[#allocation2 + $0x30] sm:$0xf]
    %v78 = vld [vmem:[#allocation2 + $0x34] sm:$0xf]
    %v79 = vld [vmem:[#allocation2 + $0x38] sm:$0xf]
    %v80 = vld [vmem:[#allocation2 + $0x3c] sm:$0xf]
    %v81 = vld [vmem:[#allocation5] sm:$0xff]
    %v82 = vld [vmem:[#allocation5 + $0x8] sm:$0xff]
    %v83 = vld [vmem:[#allocation5 + $0x10] sm:$0xff]
    %v84 = vld [vmem:[#allocation5 + $0x18] sm:$0xff]
    %v85 = vld [vmem:[#allocation5 + $0x20] sm:$0xff]
    %v86 = vld [vmem:[#allocation5 + $0x28] sm:$0xff]
    %v87 = vld [vmem:[#allocation5 + $0x30] sm:$0xff]
    %v88 = vld [vmem:[#allocation5 + $0x38] sm:$0xff]
    %v89 = vld [vmem:[#allocation5 + $0x40] sm:$0xff]
    %v90 = vld [vmem:[#allocation5 + $0x48] sm:$0xff]
    %v91 = vld [vmem:[#allocation5 + $0x50] sm:$0xff]
    %v92 = vld [vmem:[#allocation5 + $0x58] sm:$0xff]
    %v93 = vld [vmem:[#allocation5 + $0x60] sm:$0xff]
    %v94 = vld [vmem:[#allocation5 + $0x68] sm:$0xff]
    %v95 = vld [vmem:[#allocation5 + $0x70] sm:$0xff]
    %v96 = vld [vmem:[#allocation5 + $0x78] sm:$0xff]
    %v113 = vunpack.c.l.b16 %v65
    %v114 = vunpack.c.l.b16 %v66
    %v115 = vunpack.c.l.b16 %v67
    %v116 = vunpack.c.l.b16 %v68
    %v117 = vunpack.c.l.b16 %v69
    %v118 = vunpack.c.l.b16 %v70
    %v119 = vunpack.c.l.b16 %v71
    %v120 = vunpack.c.l.b16 %v72
    %v121 = vunpack.c.l.b16 %v73
    %v122 = vunpack.c.l.b16 %v74
    %v123 = vunpack.c.l.b16 %v75
    %v124 = vunpack.c.l.b16 %v76
    %v125 = vunpack.c.l.b16 %v77
    %v126 = vunpack.c.l.b16 %v78
    %v127 = vunpack.c.l.b16 %v79
    %v128 = vunpack.c.l.b16 %v80
    %v129 = vpack.c.b16 %v114, %v113
    %v130 = vpack.c.b16 %v116, %v115
    %v131 = vpack.c.b16 %v118, %v117
    %v132 = vpack.c.b16 %v120, %v119
    %v133 = vpack.c.b16 %v122, %v121
    %v134 = vpack.c.b16 %v124, %v123
    %v135 = vpack.c.b16 %v126, %v125
    %v136 = vpack.c.b16 %v128, %v127
    %v161 = vunpack.c.l.b16 %v81
    %v162 = vunpack.c.h.b16 %v81
    %v163 = vunpack.c.l.b16 %v82
    %v164 = vunpack.c.h.b16 %v82
    %v165 = vunpack.c.l.b16 %v83
    %v166 = vunpack.c.h.b16 %v83
    %v167 = vunpack.c.l.b16 %v84
    %v168 = vunpack.c.h.b16 %v84
    %v169 = vunpack.c.l.b16 %v85
    %v170 = vunpack.c.h.b16 %v85
    %v171 = vunpack.c.l.b16 %v86
    %v172 = vunpack.c.h.b16 %v86
    %v173 = vunpack.c.l.b16 %v87
    %v174 = vunpack.c.h.b16 %v87
    %v175 = vunpack.c.l.b16 %v88
    %v176 = vunpack.c.h.b16 %v88
    %v177 = vunpack.c.l.b16 %v89
    %v178 = vunpack.c.h.b16 %v89
    %v179 = vunpack.c.l.b16 %v90
    %v180 = vunpack.c.h.b16 %v90
    %v181 = vunpack.c.l.b16 %v91
    %v182 = vunpack.c.h.b16 %v91
    %v183 = vunpack.c.l.b16 %v92
    %v184 = vunpack.c.h.b16 %v92
    %v185 = vunpack.c.l.b16 %v93
    %v186 = vunpack.c.h.b16 %v93
    %v187 = vunpack.c.l.b16 %v94
    %v188 = vunpack.c.h.b16 %v94
    %v189 = vunpack.c.l.b16 %v95
    %v190 = vunpack.c.h.b16 %v95
    %v191 = vunpack.c.l.b16 %v96
    %v192 = vunpack.c.h.b16 %v96
    %v193 = vpack.c.b16 %v163, %v161
    %v194 = vpack.c.b16 %v164, %v162
    %v195 = vpack.c.b16 %v167, %v165
    %v196 = vpack.c.b16 %v168, %v166
    %v197 = vpack.c.b16 %v171, %v169
    %v198 = vpack.c.b16 %v172, %v170
    %v199 = vpack.c.b16 %v175, %v173
    %v200 = vpack.c.b16 %v176, %v174
    %v201 = vpack.c.b16 %v179, %v177
    %v202 = vpack.c.b16 %v180, %v178
    %v203 = vpack.c.b16 %v183, %v181
    %v204 = vpack.c.b16 %v184, %v182
    %v205 = vpack.c.b16 %v187, %v185
    %v206 = vpack.c.b16 %v188, %v186
    %v207 = vpack.c.b16 %v191, %v189
    %v208 = vpack.c.b16 %v192, %v190
    %225 = vmatpush.bf16.msra.mxu0 %v207
    %226 = vmatpush.bf16.msra.mxu0 %v205
    %227 = vmatpush.bf16.msra.mxu0 %v203
    %228 = vmatpush.bf16.msra.mxu0 %v201
    %229 = vmatpush.bf16.msra.mxu0 %v199
    %230 = vmatpush.bf16.msra.mxu0 %v197
    %231 = vmatpush.bf16.msra.mxu0 %v195
    %232 = vmatpush.bf16.msra.mxu0 %v193
    %233 = vmatmul.bf16.gmra.mxu0 %v129
    %v234 = vpop.f32.mrf.mxu0
    %v235 = vadd.f32 0.0, %v234
    %v236 = vpop.f32.mrf.mxu0
    %v237 = vadd.f32 0.0, %v236
    %238 = vmatmul.bf16.gmra.mxu0 %v130
    %v239 = vpop.f32.mrf.mxu0
    %v240 = vadd.f32 0.0, %v239
    %v241 = vpop.f32.mrf.mxu0
    %v242 = vadd.f32 0.0, %v241
    %243 = vmatmul.bf16.gmra.mxu0 %v131
    %v244 = vpop.f32.mrf.mxu0
    %v245 = vadd.f32 0.0, %v244
    %v246 = vpop.f32.mrf.mxu0
    %v247 = vadd.f32 0.0, %v246
    %248 = vmatmul.bf16.gmra.mxu0 %v132
    %v249 = vpop.f32.mrf.mxu0
    %v250 = vadd.f32 0.0, %v249
    %v251 = vpop.f32.mrf.mxu0
    %v252 = vadd.f32 0.0, %v251
    %253 = vmatmul.bf16.gmra.mxu0 %v133
    %v254 = vpop.f32.mrf.mxu0
    %v255 = vadd.f32 0.0, %v254
    %v256 = vpop.f32.mrf.mxu0
    %v257 = vadd.f32 0.0, %v256
    %258 = vmatmul.bf16.gmra.mxu0 %v134
    %v259 = vpop.f32.mrf.mxu0
    %v260 = vadd.f32 0.0, %v259
    %v261 = vpop.f32.mrf.mxu0
    %v262 = vadd.f32 0.0, %v261
    %263 = vmatmul.bf16.gmra.mxu0 %v135
    %v264 = vpop.f32.mrf.mxu0
    %v265 = vadd.f32 0.0, %v264
    %v266 = vpop.f32.mrf.mxu0
    %v267 = vadd.f32 0.0, %v266
    %268 = vmatmul.bf16.gmra.mxu0 %v136
    %v269 = vpop.f32.mrf.mxu0
    %v270 = vadd.f32 0.0, %v269
    %v271 = vpop.f32.mrf.mxu0
    %v272 = vadd.f32 0.0, %v271
    %273 = vdwg.mxu0
    %274 = vmatpush.bf16.msra.mxu0 %v208
    %275 = vmatpush.bf16.msra.mxu0 %v206
    %276 = vmatpush.bf16.msra.mxu0 %v204
    %277 = vmatpush.bf16.msra.mxu0 %v202
    %278 = vmatpush.bf16.msra.mxu0 %v200
    %279 = vmatpush.bf16.msra.mxu0 %v198
    %280 = vmatpush.bf16.msra.mxu0 %v196
    %281 = vmatpush.bf16.msra.mxu0 %v194
    %282 = vmatmul.bf16.gmra.mxu0 %v129
    %v283 = vpop.f32.mrf.mxu0
    %v284 = vadd.f32 0.0, %v283
    %v285 = vpop.f32.mrf.mxu0
    %v286 = vadd.f32 0.0, %v285
    %287 = vmatmul.bf16.gmra.mxu0 %v130
    %v288 = vpop.f32.mrf.mxu0
    %v289 = vadd.f32 0.0, %v288
    %v290 = vpop.f32.mrf.mxu0
    %v291 = vadd.f32 0.0, %v290
    %292 = vmatmul.bf16.gmra.mxu0 %v131
    %v293 = vpop.f32.mrf.mxu0
    %v294 = vadd.f32 0.0, %v293
    %v295 = vpop.f32.mrf.mxu0
    %v296 = vadd.f32 0.0, %v295
    %297 = vmatmul.bf16.gmra.mxu0 %v132
    %v298 = vpop.f32.mrf.mxu0
    %v299 = vadd.f32 0.0, %v298
    %v300 = vpop.f32.mrf.mxu0
    %v301 = vadd.f32 0.0, %v300
    %302 = vmatmul.bf16.gmra.mxu0 %v133
    %v303 = vpop.f32.mrf.mxu0
    %v304 = vadd.f32 0.0, %v303
    %v305 = vpop.f32.mrf.mxu0
    %v306 = vadd.f32 0.0, %v305
    %307 = vmatmul.bf16.gmra.mxu0 %v134
    %v308 = vpop.f32.mrf.mxu0
    %v309 = vadd.f32 0.0, %v308
    %v310 = vpop.f32.mrf.mxu0
    %v311 = vadd.f32 0.0, %v310
    %312 = vmatmul.bf16.gmra.mxu0 %v135
    %v313 = vpop.f32.mrf.mxu0
    %v314 = vadd.f32 0.0, %v313
    %v315 = vpop.f32.mrf.mxu0
    %v316 = vadd.f32 0.0, %v315
    %317 = vmatmul.bf16.gmra.mxu0 %v136
    %v318 = vpop.f32.mrf.mxu0
    %v319 = vadd.f32 0.0, %v318
    %v320 = vpop.f32.mrf.mxu0
    %v321 = vadd.f32 0.0, %v320
    %322 = vdwg.mxu0
    %v323 = vpack.c.bf16 %v284, %v235
    %v324 = vpack.c.bf16 %v286, %v237
    %v325 = vpack.c.bf16 %v289, %v240
    %v326 = vpack.c.bf16 %v291, %v242
    %v327 = vpack.c.bf16 %v294, %v245
    %v328 = vpack.c.bf16 %v296, %v247
    %v329 = vpack.c.bf16 %v299, %v250
    %v330 = vpack.c.bf16 %v301, %v252
    %v331 = vpack.c.bf16 %v304, %v255
    %v332 = vpack.c.bf16 %v306, %v257
    %v333 = vpack.c.bf16 %v309, %v260
    %v334 = vpack.c.bf16 %v311, %v262
    %v335 = vpack.c.bf16 %v314, %v265
    %v336 = vpack.c.bf16 %v316, %v267
    %v337 = vpack.c.bf16 %v319, %v270
    %v338 = vpack.c.bf16 %v321, %v272
    %v339 = vld [vmem:[#allocation7] sm:$0xf]
    %v340 = vld [vmem:[#allocation7 + $0x4] sm:$0xf]
    %v341 = vld [vmem:[#allocation7 + $0x8] sm:$0xf]
    %v342 = vld [vmem:[#allocation7 + $0xc] sm:$0xf]
    %v343 = vld [vmem:[#allocation7 + $0x10] sm:$0xf]
    %v344 = vld [vmem:[#allocation7 + $0x14] sm:$0xf]
    %v345 = vld [vmem:[#allocation7 + $0x18] sm:$0xf]
    %v346 = vld [vmem:[#allocation7 + $0x1c] sm:$0xf]
    %v347 = vld [vmem:[#allocation7 + $0x20] sm:$0xf]
    %v348 = vld [vmem:[#allocation7 + $0x24] sm:$0xf]
    %v349 = vld [vmem:[#allocation7 + $0x28] sm:$0xf]
    %v350 = vld [vmem:[#allocation7 + $0x2c] sm:$0xf]
    %v351 = vld [vmem:[#allocation7 + $0x30] sm:$0xf]
    %v352 = vld [vmem:[#allocation7 + $0x34] sm:$0xf]
    %v353 = vld [vmem:[#allocation7 + $0x38] sm:$0xf]
    %v354 = vld [vmem:[#allocation7 + $0x3c] sm:$0xf]
    %v355 = vld [vmem:[#allocation7 + $0x40] sm:$0xf]
    %v356 = vld [vmem:[#allocation7 + $0x44] sm:$0xf]
    %v357 = vld [vmem:[#allocation7 + $0x48] sm:$0xf]
    %v358 = vld [vmem:[#allocation7 + $0x4c] sm:$0xf]
    %v359 = vld [vmem:[#allocation7 + $0x50] sm:$0xf]
    %v360 = vld [vmem:[#allocation7 + $0x54] sm:$0xf]
    %v361 = vld [vmem:[#allocation7 + $0x58] sm:$0xf]
    %v362 = vld [vmem:[#allocation7 + $0x5c] sm:$0xf]
    %v363 = vld [vmem:[#allocation7 + $0x60] sm:$0xf]
    %v364 = vld [vmem:[#allocation7 + $0x64] sm:$0xf]
    %v365 = vld [vmem:[#allocation7 + $0x68] sm:$0xf]
    %v366 = vld [vmem:[#allocation7 + $0x6c] sm:$0xf]
    %v367 = vld [vmem:[#allocation7 + $0x70] sm:$0xf]
    %v368 = vld [vmem:[#allocation7 + $0x74] sm:$0xf]
    %v369 = vld [vmem:[#allocation7 + $0x78] sm:$0xf]
    %v370 = vld [vmem:[#allocation7 + $0x7c] sm:$0xf]
    %v387 = vunpack.c.l.b16 %v323
    %v388 = vunpack.c.h.b16 %v323
    %v389 = vunpack.c.l.b16 %v324
    %v390 = vunpack.c.h.b16 %v324
    %v391 = vunpack.c.l.b16 %v325
    %v392 = vunpack.c.h.b16 %v325
    %v393 = vunpack.c.l.b16 %v326
    %v394 = vunpack.c.h.b16 %v326
    %v395 = vunpack.c.l.b16 %v327
    %v396 = vunpack.c.h.b16 %v327
    %v397 = vunpack.c.l.b16 %v328
    %v398 = vunpack.c.h.b16 %v328
    %v399 = vunpack.c.l.b16 %v329
    %v400 = vunpack.c.h.b16 %v329
    %v401 = vunpack.c.l.b16 %v330
    %v402 = vunpack.c.h.b16 %v330
    %v403 = vunpack.c.l.b16 %v331
    %v404 = vunpack.c.h.b16 %v331
    %v405 = vunpack.c.l.b16 %v332
    %v406 = vunpack.c.h.b16 %v332
    %v407 = vunpack.c.l.b16 %v333
    %v408 = vunpack.c.h.b16 %v333
    %v409 = vunpack.c.l.b16 %v334
    %v410 = vunpack.c.h.b16 %v334
    %v411 = vunpack.c.l.b16 %v335
    %v412 = vunpack.c.h.b16 %v335
    %v413 = vunpack.c.l.b16 %v336
    %v414 = vunpack.c.h.b16 %v336
    %v415 = vunpack.c.l.b16 %v337
    %v416 = vunpack.c.h.b16 %v337
    %v417 = vunpack.c.l.b16 %v338
    %v418 = vunpack.c.h.b16 %v338
    %v419 = vpack.c.b16 %v389, %v387
    %v420 = vpack.c.b16 %v390, %v388
    %v421 = vpack.c.b16 %v393, %v391
    %v422 = vpack.c.b16 %v394, %v392
    %v423 = vpack.c.b16 %v397, %v395
    %v424 = vpack.c.b16 %v398, %v396
    %v425 = vpack.c.b16 %v401, %v399
    %v426 = vpack.c.b16 %v402, %v400
    %v427 = vpack.c.b16 %v405, %v403
    %v428 = vpack.c.b16 %v406, %v404
    %v429 = vpack.c.b16 %v409, %v407
    %v430 = vpack.c.b16 %v410, %v408
    %v431 = vpack.c.b16 %v413, %v411
    %v432 = vpack.c.b16 %v414, %v412
    %v433 = vpack.c.b16 %v417, %v415
    %v434 = vpack.c.b16 %v418, %v416
    %v483 = vunpack.c.l.b16 %v339
    %v484 = vunpack.c.l.b16 %v340
    %v485 = vunpack.c.l.b16 %v341
    %v486 = vunpack.c.l.b16 %v342
    %v487 = vunpack.c.l.b16 %v343
    %v488 = vunpack.c.l.b16 %v344
    %v489 = vunpack.c.l.b16 %v345
    %v490 = vunpack.c.l.b16 %v346
    %v491 = vunpack.c.l.b16 %v347
    %v492 = vunpack.c.l.b16 %v348
    %v493 = vunpack.c.l.b16 %v349
    %v494 = vunpack.c.l.b16 %v350
    %v495 = vunpack.c.l.b16 %v351
    %v496 = vunpack.c.l.b16 %v352
    %v497 = vunpack.c.l.b16 %v353
    %v498 = vunpack.c.l.b16 %v354
    %v499 = vunpack.c.l.b16 %v355
    %v500 = vunpack.c.l.b16 %v356
    %v501 = vunpack.c.l.b16 %v357
    %v502 = vunpack.c.l.b16 %v358
    %v503 = vunpack.c.l.b16 %v359
    %v504 = vunpack.c.l.b16 %v360
    %v505 = vunpack.c.l.b16 %v361
    %v506 = vunpack.c.l.b16 %v362
    %v507 = vunpack.c.l.b16 %v363
    %v508 = vunpack.c.l.b16 %v364
    %v509 = vunpack.c.l.b16 %v365
    %v510 = vunpack.c.l.b16 %v366
    %v511 = vunpack.c.l.b16 %v367
    %v512 = vunpack.c.l.b16 %v368
    %v513 = vunpack.c.l.b16 %v369
    %v514 = vunpack.c.l.b16 %v370
    %v515 = vpack.c.b16 %v484, %v483
    %v516 = vpack.c.b16 %v486, %v485
    %v517 = vpack.c.b16 %v488, %v487
    %v518 = vpack.c.b16 %v490, %v489
    %v519 = vpack.c.b16 %v492, %v491
    %v520 = vpack.c.b16 %v494, %v493
    %v521 = vpack.c.b16 %v496, %v495
    %v522 = vpack.c.b16 %v498, %v497
    %v523 = vpack.c.b16 %v500, %v499
    %v524 = vpack.c.b16 %v502, %v501
    %v525 = vpack.c.b16 %v504, %v503
    %v526 = vpack.c.b16 %v506, %v505
    %v527 = vpack.c.b16 %v508, %v507
    %v528 = vpack.c.b16 %v510, %v509
    %v529 = vpack.c.b16 %v512, %v511
    %v530 = vpack.c.b16 %v514, %v513
    %547 = vmatpush.bf16.msra.mxu0 %v522
    %548 = vmatpush.bf16.msra.mxu0 %v521
    %549 = vmatpush.bf16.msra.mxu0 %v520
    %550 = vmatpush.bf16.msra.mxu0 %v519
    %551 = vmatpush.bf16.msra.mxu0 %v518
    %552 = vmatpush.bf16.msra.mxu0 %v517
    %553 = vmatpush.bf16.msra.mxu0 %v516
    %554 = vmatpush.bf16.msra.mxu0 %v515
    %555 = vmatmul.bf16.gmra.mxu0 %v419
    %v556 = vpop.f32.mrf.mxu0
    %v557 = vadd.f32 0.0, %v556
    %v558 = vpop.f32.mrf.mxu0
    %v559 = vadd.f32 0.0, %v558
    %560 = vmatmul.bf16.gmra.mxu0 %v421
    %v561 = vpop.f32.mrf.mxu0
    %v562 = vadd.f32 0.0, %v561
    %v563 = vpop.f32.mrf.mxu0
    %v564 = vadd.f32 0.0, %v563
    %565 = vmatmul.bf16.gmra.mxu0 %v423
    %v566 = vpop.f32.mrf.mxu0
    %v567 = vadd.f32 0.0, %v566
    %v568 = vpop.f32.mrf.mxu0
    %v569 = vadd.f32 0.0, %v568
    %570 = vmatmul.bf16.gmra.mxu0 %v425
    %v571 = vpop.f32.mrf.mxu0
    %v572 = vadd.f32 0.0, %v571
    %v573 = vpop.f32.mrf.mxu0
    %v574 = vadd.f32 0.0, %v573
    %575 = vmatmul.bf16.gmra.mxu0 %v427
    %v576 = vpop.f32.mrf.mxu0
    %v577 = vadd.f32 0.0, %v576
    %v578 = vpop.f32.mrf.mxu0
    %v579 = vadd.f32 0.0, %v578
    %580 = vmatmul.bf16.gmra.mxu0 %v429
    %v581 = vpop.f32.mrf.mxu0
    %v582 = vadd.f32 0.0, %v581
    %v583 = vpop.f32.mrf.mxu0
    %v584 = vadd.f32 0.0, %v583
    %585 = vmatmul.bf16.gmra.mxu0 %v431
    %v586 = vpop.f32.mrf.mxu0
    %v587 = vadd.f32 0.0, %v586
    %v588 = vpop.f32.mrf.mxu0
    %v589 = vadd.f32 0.0, %v588
    %590 = vmatmul.bf16.gmra.mxu0 %v433
    %v591 = vpop.f32.mrf.mxu0
    %v592 = vadd.f32 0.0, %v591
    %v593 = vpop.f32.mrf.mxu0
    %v594 = vadd.f32 0.0, %v593
    %595 = vdwg.mxu0
    %596 = vmatpush.bf16.msra.mxu0 %v530
    %597 = vmatpush.bf16.msra.mxu0 %v529
    %598 = vmatpush.bf16.msra.mxu0 %v528
    %599 = vmatpush.bf16.msra.mxu0 %v527
    %600 = vmatpush.bf16.msra.mxu0 %v526
    %601 = vmatpush.bf16.msra.mxu0 %v525
    %602 = vmatpush.bf16.msra.mxu0 %v524
    %603 = vmatpush.bf16.msra.mxu0 %v523
    %604 = vmatmul.bf16.gmra.mxu0 %v420
    %v605 = vpop.f32.mrf.mxu0
    %v606 = vadd.f32 %v557, %v605
    %v607 = vpop.f32.mrf.mxu0
    %v608 = vadd.f32 %v559, %v607
    %609 = vmatmul.bf16.gmra.mxu0 %v422
    %v610 = vpop.f32.mrf.mxu0
    %v611 = vadd.f32 %v562, %v610
    %v612 = vpop.f32.mrf.mxu0
    %v613 = vadd.f32 %v564, %v612
    %614 = vmatmul.bf16.gmra.mxu0 %v424
    %v615 = vpop.f32.mrf.mxu0
    %v616 = vadd.f32 %v567, %v615
    %v617 = vpop.f32.mrf.mxu0
    %v618 = vadd.f32 %v569, %v617
    %619 = vmatmul.bf16.gmra.mxu0 %v426
    %v620 = vpop.f32.mrf.mxu0
    %v621 = vadd.f32 %v572, %v620
    %v622 = vpop.f32.mrf.mxu0
    %v623 = vadd.f32 %v574, %v622
    %624 = vmatmul.bf16.gmra.mxu0 %v428
    %v625 = vpop.f32.mrf.mxu0
    %v626 = vadd.f32 %v577, %v625
    %v627 = vpop.f32.mrf.mxu0
    %v628 = vadd.f32 %v579, %v627
    %629 = vmatmul.bf16.gmra.mxu0 %v430
    %v630 = vpop.f32.mrf.mxu0
    %v631 = vadd.f32 %v582, %v630
    %v632 = vpop.f32.mrf.mxu0
    %v633 = vadd.f32 %v584, %v632
    %634 = vmatmul.bf16.gmra.mxu0 %v432
    %v635 = vpop.f32.mrf.mxu0
    %v636 = vadd.f32 %v587, %v635
    %v637 = vpop.f32.mrf.mxu0
    %v638 = vadd.f32 %v589, %v637
    %639 = vmatmul.bf16.gmra.mxu0 %v434
    %v640 = vpop.f32.mrf.mxu0
    %v641 = vadd.f32 %v592, %v640
    %v642 = vpop.f32.mrf.mxu0
    %v643 = vadd.f32 %v594, %v642
    %644 = vdwg.mxu0
    %645 = vst [vmem:[#allocation9] sm:$0xff] %v606
    %646 = vst [vmem:[#allocation9 + $0x8] sm:$0xff] %v608
    %647 = vst [vmem:[#allocation9 + $0x10] sm:$0xff] %v611
    %648 = vst [vmem:[#allocation9 + $0x18] sm:$0xff] %v613
    %649 = vst [vmem:[#allocation9 + $0x20] sm:$0xff] %v616
    %650 = vst [vmem:[#allocation9 + $0x28] sm:$0xff] %v618
    %651 = vst [vmem:[#allocation9 + $0x30] sm:$0xff] %v621
    %652 = vst [vmem:[#allocation9 + $0x38] sm:$0xff] %v623
    %653 = vst [vmem:[#allocation9 + $0x40] sm:$0xff] %v626
    %654 = vst [vmem:[#allocation9 + $0x48] sm:$0xff] %v628
    %655 = vst [vmem:[#allocation9 + $0x50] sm:$0xff] %v631
    %656 = vst [vmem:[#allocation9 + $0x58] sm:$0xff] %v633
    %657 = vst [vmem:[#allocation9 + $0x60] sm:$0xff] %v636
    %658 = vst [vmem:[#allocation9 + $0x68] sm:$0xff] %v638
    %659 = vst [vmem:[#allocation9 + $0x70] sm:$0xff] %v641
    %660 = vst [vmem:[#allocation9 + $0x78] sm:$0xff] %v643
    %661 = vst [vmem:[#allocation8] sm:$0xff] %v323
    %662 = vst [vmem:[#allocation8 + $0x8] sm:$0xff] %v324
    %663 = vst [vmem:[#allocation8 + $0x10] sm:$0xff] %v325
    %664 = vst [vmem:[#allocation8 + $0x18] sm:$0xff] %v326
    %665 = vst [vmem:[#allocation8 + $0x20] sm:$0xff] %v327
    %666 = vst [vmem:[#allocation8 + $0x28] sm:$0xff] %v328
    %667 = vst [vmem:[#allocation8 + $0x30] sm:$0xff] %v329
    %668 = vst [vmem:[#allocation8 + $0x38] sm:$0xff] %v330
    %669 = vst [vmem:[#allocation8 + $0x40] sm:$0xff] %v331
    %670 = vst [vmem:[#allocation8 + $0x48] sm:$0xff] %v332
    %671 = vst [vmem:[#allocation8 + $0x50] sm:$0xff] %v333
    %672 = vst [vmem:[#allocation8 + $0x58] sm:$0xff] %v334
    %673 = vst [vmem:[#allocation8 + $0x60] sm:$0xff] %v335
    %674 = vst [vmem:[#allocation8 + $0x68] sm:$0xff] %v336
    %675 = vst [vmem:[#allocation8 + $0x70] sm:$0xff] %v337
    %676 = vst [vmem:[#allocation8 + $0x78] sm:$0xff] %v338
    // Predicated region
    $region26: #{tpu_custom_call.1} parent=1 // pred_check
      _
    $region27: #{tpu_custom_call.1} parent=1 // pred_check_branch
      %678 = sbr.rel (0) target = $region29
    $region28: #{tpu_custom_call.1} parent=1 // pred_region
      %680 = vsyncadd [#allocation4], 0
      %s681 = sshll.u32 [#allocation8], 4
      %s682 = int_to_ptr.vmem [resolvable:$true] %s681
      %s683 = sshll.u32 %s3, 4
      %s684 = int_to_ptr.hbm [resolvable:$true] %s683
      %689 = dma.vmem_to_hbm [thread:$0]  %s682, 2048, %s684, [#allocation4], 128, 128, 8
    $region29: #{tpu_custom_call.1} parent=1 // pred_fallthru
      _
    // Predicated region
    $region30: #{tpu_custom_call.1} parent=1 // pred_check
      _
    $region31: #{tpu_custom_call.1} parent=1 // pred_check_branch
      %691 = sbr.rel (0) target = $region33
    $region32: #{tpu_custom_call.1} parent=1 // pred_region
      %693 = vsyncadd [#allocation10], 0
      %s694 = sshll.u32 [#allocation9], 4
      %s695 = int_to_ptr.vmem [resolvable:$true] %s694
      %s696 = sshll.u32 %s4, 4
      %s697 = int_to_ptr.hbm [resolvable:$true] %s696
      %702 = dma.vmem_to_hbm [thread:$0]  %s695, 2048, %s697, [#allocation10], 128, 128, 8
    $region33: #{tpu_custom_call.1} parent=1 // pred_fallthru
      _
    // Predicated region
    $region34: #{tpu_custom_call.1} parent=1 // pred_check
      _
    $region35: #{tpu_custom_call.1} parent=1 // pred_check_branch
      %704 = sbr.rel (0) target = $region37
    $region36: #{tpu_custom_call.1} parent=1 // pred_region
      %706 = dma.done [#allocation4], 2048
    $region37: #{tpu_custom_call.1} parent=1 // pred_fallthru
      _
    // Predicated region
    $region38: #{tpu_custom_call.1} parent=1 // pred_check
      _
    $region39: #{tpu_custom_call.1} parent=1 // pred_check_branch
      %708 = sbr.rel (0) target = $region41
    $region40: #{tpu_custom_call.1} parent=1 // pred_region
      %710 = dma.done [#allocation10], 2048
    $region41: #{tpu_custom_call.1} parent=1 // pred_fallthru
      _
    %711 = vsyncpa [#allocation3], 1
    %712 = vsyncpa [#allocation6], 1
    %713 = vsyncpa [#allocation4], 1
    %714 = vsyncpa [#allocation10], 1

</llo_original>
